<compile_context>
chip_gen: v7x
topology: tpu7x:2x2x1
jax: 0.10.0
libtpu: 0.0.40
codegen_flags: <defaults>
</compile_context>

<pallas_src>
import jax
import jax.numpy as jnp
import numpy as np
from jax.experimental import pallas as pl
from jax.experimental.pallas import tpu as pltpu

_LANE = 128                       # vreg lane width
_SUBLANE = 8                      # f32 vreg sublane depth
_VMEM_LIMIT = 32 * 1024 * 1024    # explicit scoped-VMEM budget (working set ~200 KiB)


def _round_up(x, m):
    return (x + m - 1) // m * m


# ---------------------------------------------------------------------------
# Fused Pallas kernel (vision + text in one launch)
# ---------------------------------------------------------------------------

def _clip_fused_kernel(tok_ref,              # (B, S) int32   SMEM (scalar prefetch)
                       xv_ref,               # (B*P, Kpad)    bf16  im2col patch rows
                       wp_ref, bp_ref,       # (Kpad, Hpad) bf16 / (1, Hpad) f32
                       poolv_ref,            # (Bpad, B*P)    f32   block-diag 1/P
                       wv_ref, bv_ref,       # (Hpad, Dpad) bf16 / (1, Dpad) f32
                       emb_ref,              # (Vpad, 1, Hpad) f32  embedding table
                       wt_ref, bt_ref,       # (Hpad, Dpad) bf16 / (1, Dpad) f32
                       img_ref, txt_ref):    # (Bpad, Dpad) f32 each
    # ------------------ vision branch ------------------
    # Patch embedding for the whole batch in one MXU matmul, f32 accumulation.
    h = jnp.dot(xv_ref[...], wp_ref[...],
                preferred_element_type=jnp.float32) + bp_ref[...]          # (B*P, Hpad)
    # Mean-pool over patches as a block-diagonal (1/P) MXU matmul (no XLU reduce);
    # rows >= B of the pooling matrix are zero, so padded output rows stay benign.
    pooled_v = jnp.dot(poolv_ref[...], h,
                       preferred_element_type=jnp.float32)                 # (Bpad, Hpad)
    proj_v = jnp.dot(pooled_v.astype(jnp.bfloat16), wv_ref[...],
                     preferred_element_type=jnp.float32) + bv_ref[...]     # (Bpad, Dpad)
    inv_v = jax.lax.rsqrt(jnp.sum(proj_v * proj_v, axis=-1, keepdims=True) + 1e-12)
    img_ref[...] = (proj_v * inv_v).astype(img_ref.dtype)

    # ------------------ text branch ------------------
    b_sz, s_len = tok_ref.shape                                            # static
    bpad = txt_ref.shape[0]
    hpad = emb_ref.shape[2]
    rows = []
    for b in range(b_sz):
        # Dynamic leading-axis gather from the VMEM-resident table, accumulated
        # straight into the per-batch mean (no (B*S, H) intermediate).
        acc = emb_ref[tok_ref[b, 0]]                                       # (1, Hpad) f32
        for s in range(1, s_len):
            acc = acc + emb_ref[tok_ref[b, s]]
        rows.append(acc * (1.0 / s_len))
    if bpad > b_sz:
        rows.append(jnp.zeros((bpad - b_sz, hpad), jnp.float32))
    pooled_t = jnp.concatenate(rows, axis=0)                               # (Bpad, Hpad)
    proj_t = jnp.dot(pooled_t.astype(jnp.bfloat16), wt_ref[...],
                     preferred_element_type=jnp.float32) + bt_ref[...]     # (Bpad, Dpad)
    inv_t = jax.lax.rsqrt(jnp.sum(proj_t * proj_t, axis=-1, keepdims=True) + 1e-12)
    txt_ref[...] = (proj_t * inv_t).astype(txt_ref.dtype)


# ---------------------------------------------------------------------------
# Model
# ---------------------------------------------------------------------------

class CLIPModelPallas:
    def __init__(self, key, *, d_model=64, hidden=32, patch=4, in_ch=3, vocab=100):
        self.d_model = d_model
        self.hidden = hidden
        self.patch = patch
        self.in_ch = in_ch
        self.vocab = vocab

        kdim = in_ch * patch * patch
        self.kdim = kdim
        self.kpad = _round_up(kdim, _LANE)
        self.hpad = _round_up(hidden, _LANE)
        self.dpad = _round_up(d_model, _LANE)
        self.vpad = _round_up(vocab, _LANE)

        k = jax.random.split(key, 5)
        # f32 master parameters (also used by the pure-JAX reference check).
        self.w_patch_f32 = 0.02 * jax.random.normal(k[0], (kdim, hidden), jnp.float32)
        self.b_patch_f32 = jnp.zeros((1, hidden), jnp.float32)
        self.w_vproj_f32 = 0.02 * jax.random.normal(k[1], (hidden, d_model), jnp.float32)
        self.b_vproj_f32 = jnp.zeros((1, d_model), jnp.float32)
        self.emb_f32 = 0.02 * jax.random.normal(k[2], (vocab, hidden), jnp.float32)
        self.w_tproj_f32 = 0.02 * jax.random.normal(k[3], (hidden, d_model), jnp.float32)
        self.b_tproj_f32 = jnp.zeros((1, d_model), jnp.float32)

        def pad2(a, rows, cols):
            return jnp.pad(a, ((0, rows - a.shape[0]), (0, cols - a.shape[1])))

        # Lane-padded (128-aligned) kernel parameters, padded once at init.
        # Matmul weights go to bf16 for the MXU; biases stay f32 for the epilogue.
        self.w_patch = pad2(self.w_patch_f32, self.kpad, self.hpad).astype(jnp.bfloat16)
        self.b_patch = pad2(self.b_patch_f32, 1, self.hpad)
        self.w_vproj = pad2(self.w_vproj_f32, self.hpad, self.dpad).astype(jnp.bfloat16)
        self.b_vproj = pad2(self.b_vproj_f32, 1, self.dpad)
        # Embedding table stays f32 (exact gather + f32 pooling); stored (Vpad, 1, Hpad)
        # so the in-kernel gather is a dynamic index on the leading (non-tiled) axis.
        self.emb_table = pad2(self.emb_f32, self.vpad, self.hpad).reshape(
            self.vpad, 1, self.hpad)
        self.w_tproj = pad2(self.w_tproj_f32, self.hpad, self.dpad).astype(jnp.bfloat16)
        self.b_tproj = pad2(self.b_tproj_f32, 1, self.dpad)

    # -------------------- forward (single fused kernel) --------------------
    def __call__(self, images, text_tokens):
        B, C, H, W = images.shape
        p = self.patch
        ph, pw = H // p, W // p
        n_patch = ph * pw
        bp = B * n_patch
        bpad = _round_up(B, _SUBLANE)

        # TODO(synk): im2col via XLA reshape/transpose; at real image sizes fold this
        # into a BlockSpec index_map (or take NHWC input) to avoid the extra HBM pass.
        x = images.reshape(B, C, ph, p, pw, p)
        x = jnp.transpose(x, (0, 2, 4, 1, 3, 5)).reshape(bp, C * p * p)
        # Lane-pad K to 128 and cast activations to bf16 for the MXU.
        x = jnp.pad(x, ((0, 0), (0, self.kpad - C * p * p))).astype(jnp.bfloat16)

        # Block-diagonal (1/P) pooling matrix for the vision branch (trace-time constant).
        pm = np.zeros((bpad, bp), np.float32)
        for b in range(B):
            pm[b, b * n_patch:(b + 1) * n_patch] = 1.0 / n_patch
        poolv = jnp.asarray(pm)

        img_pad, txt_pad = pl.pallas_call(
            _clip_fused_kernel,
            out_shape=(jax.ShapeDtypeStruct((bpad, self.dpad), jnp.float32),
                       jax.ShapeDtypeStruct((bpad, self.dpad), jnp.float32)),
            grid_spec=pltpu.PrefetchScalarGridSpec(
                num_scalar_prefetch=1,                       # token ids land in SMEM
                grid=(1,),
                in_specs=[
                    pl.BlockSpec((bp, self.kpad), lambda i, tok: (0, 0)),
                    pl.BlockSpec((self.kpad, self.hpad), lambda i, tok: (0, 0)),
                    pl.BlockSpec((1, self.hpad), lambda i, tok: (0, 0)),
                    pl.BlockSpec((bpad, bp), lambda i, tok: (0, 0)),
                    pl.BlockSpec((self.hpad, self.dpad), lambda i, tok: (0, 0)),
                    pl.BlockSpec((1, self.dpad), lambda i, tok: (0, 0)),
                    pl.BlockSpec((self.vpad, 1, self.hpad), lambda i, tok: (0, 0, 0)),
                    pl.BlockSpec((self.hpad, self.dpad), lambda i, tok: (0, 0)),
                    pl.BlockSpec((1, self.dpad), lambda i, tok: (0, 0)),
                ],
                out_specs=[
                    pl.BlockSpec((bpad, self.dpad), lambda i, tok: (0, 0)),
                    pl.BlockSpec((bpad, self.dpad), lambda i, tok: (0, 0)),
                ],
            ),
            compiler_params=pltpu.CompilerParams(
                dimension_semantics=("arbitrary",),
                vmem_limit_bytes=_VMEM_LIMIT,
            ),
        )(text_tokens.astype(jnp.int32), x, self.w_patch, self.b_patch, poolv,
          self.w_vproj, self.b_vproj, self.emb_table, self.w_tproj, self.b_tproj)

        # Drop the sublane (batch) padding and the d_model lane padding.
        return img_pad[:B, :self.d_model], txt_pad[:B, :self.d_model]


# ---------------------------------------------------------------------------
# Pure-JAX f32 reference (for correctness check only)
# ---------------------------------------------------------------------------

def _reference_forward(model, images, tokens):
    B, C, H, W = images.shape
    p = model.patch
    ph, pw = H // p, W // p
    x = images.reshape(B, C, ph, p, pw, p)
    x = jnp.transpose(x, (0, 2, 4, 1, 3, 5)).reshape(B, ph * pw, C * p * p)
    h = x @ model.w_patch_f32 + model.b_patch_f32                 # (B, P, hidden)
    v = h.mean(axis=1) @ model.w_vproj_f32 + model.b_vproj_f32    # (B, d_model)
    v = v / jnp.sqrt(jnp.sum(v * v, axis=-1, keepdims=True) + 1e-12)
    e = jnp.take(model.emb_f32, tokens, axis=0)                   # (B, S, hidden)
    t = e.mean(axis=1) @ model.w_tproj_f32 + model.b_tproj_f32    # (B, d_model)
    t = t / jnp.sqrt(jnp.sum(t * t, axis=-1, keepdims=True) + 1e-12)
    return v, t


# ---------------------------------------------------------------------------
# Main
# ---------------------------------------------------------------------------

if __name__ == "__main__":
    key = jax.random.PRNGKey(0)
    k_img, k_tok, k_model = jax.random.split(key, 3)

    B, C, H, W = 2, 3, 16, 16
    seq = 8
    vocab = 100

    images = jax.random.normal(k_img, (B, C, H, W), jnp.float32)
    text_tokens = jax.random.randint(k_tok, (B, seq), 0, vocab, dtype=jnp.int32)

    model = CLIPModelPallas(k_model, d_model=64, hidden=32, patch=4,
                            in_ch=C, vocab=vocab)

    forward = jax.jit(lambda imgs, toks: model(imgs, toks))
    img_emb, txt_emb = forward(images, text_tokens)
    img_emb = jax.block_until_ready(img_emb)
    txt_emb = jax.block_until_ready(txt_emb)

    assert img_emb.shape == (B, model.d_model)
    assert txt_emb.shape == (B, model.d_model)
    assert bool(jnp.all(jnp.isfinite(img_emb))) and bool(jnp.all(jnp.isfinite(txt_emb)))
    # Unit-norm check (L2 norm is computed over the real d_model lanes; padded lanes are 0).
    assert bool(jnp.allclose(jnp.linalg.norm(img_emb, axis=-1), 1.0, atol=1e-3))
    assert bool(jnp.allclose(jnp.linalg.norm(txt_emb, axis=-1), 1.0, atol=1e-3))
    # Pure-JAX f32 reference; generous tolerance because MXU inputs are bf16.
    v_ref, t_ref = _reference_forward(model, images, text_tokens)
    assert bool(jnp.allclose(img_emb, v_ref, atol=3e-2))
    assert bool(jnp.allclose(txt_emb, t_ref, atol=3e-2))

    print("KERNEL_OK")
</pallas_src>

<mosaic_0001>
module attributes {stable_mosaic.version = 11 : i64} {
  func.func @_clip_fused_kernel(%arg0: i32, %arg1: memref<2x8xi32, #tpu.memory_space<smem>>, %arg2: memref<32x128xbf16, #tpu.memory_space<vmem>>, %arg3: memref<128x128xbf16, #tpu.memory_space<vmem>>, %arg4: memref<1x128xf32, #tpu.memory_space<vmem>>, %arg5: memref<8x32xf32, #tpu.memory_space<vmem>>, %arg6: memref<128x128xbf16, #tpu.memory_space<vmem>>, %arg7: memref<1x128xf32, #tpu.memory_space<vmem>>, %arg8: memref<128x1x128xf32, #tpu.memory_space<vmem>>, %arg9: memref<128x128xbf16, #tpu.memory_space<vmem>>, %arg10: memref<1x128xf32, #tpu.memory_space<vmem>>, %arg11: memref<8x128xf32, #tpu.memory_space<vmem>>, %arg12: memref<8x128xf32, #tpu.memory_space<vmem>>) attributes {dimension_semantics = [#tpu.dimension_semantics<arbitrary>], iteration_bounds = array<i64: 1>, scalar_prefetch = 1 : i64, scratch_operands = 0 : i64, tpu.core_type = #tpu.core_type<tc>, window_params = [{pipeline_mode = #tpu.pipeline_mode<synchronous>, transform_indices = @transform_0, window_bounds = array<i64: 32, 128>}, {pipeline_mode = #tpu.pipeline_mode<synchronous>, transform_indices = @transform_1, window_bounds = array<i64: 128, 128>}, {pipeline_mode = #tpu.pipeline_mode<synchronous>, transform_indices = @transform_2, window_bounds = array<i64: 1, 128>}, {pipeline_mode = #tpu.pipeline_mode<synchronous>, transform_indices = @transform_3, window_bounds = array<i64: 8, 32>}, {pipeline_mode = #tpu.pipeline_mode<synchronous>, transform_indices = @transform_4, window_bounds = array<i64: 128, 128>}, {pipeline_mode = #tpu.pipeline_mode<synchronous>, transform_indices = @transform_5, window_bounds = array<i64: 1, 128>}, {pipeline_mode = #tpu.pipeline_mode<synchronous>, transform_indices = @transform_6, window_bounds = array<i64: 128, 1, 128>}, {pipeline_mode = #tpu.pipeline_mode<synchronous>, transform_indices = @transform_7, window_bounds = array<i64: 128, 128>}, {pipeline_mode = #tpu.pipeline_mode<synchronous>, transform_indices = @transform_8, window_bounds = array<i64: 1, 128>}, {pipeline_mode = #tpu.pipeline_mode<synchronous>, transform_indices = @transform_9, window_bounds = array<i64: 8, 128>}, {pipeline_mode = #tpu.pipeline_mode<synchronous>, transform_indices = @transform_10, window_bounds = array<i64: 8, 128>}]} {
    %c0 = arith.constant 0 : index
    %c0_0 = arith.constant 0 : index
    %0 = vector.load %arg2[%c0, %c0_0] : memref<32x128xbf16, #tpu.memory_space<vmem>>, vector<32x128xbf16>
    %c0_1 = arith.constant 0 : index
    %c0_2 = arith.constant 0 : index
    %1 = vector.load %arg3[%c0_1, %c0_2] : memref<128x128xbf16, #tpu.memory_space<vmem>>, vector<128x128xbf16>
    %cst = arith.constant dense<0.000000e+00> : vector<32x128xf32>
    %2 = tpu.matmul %0, %1, %cst {dimension_numbers = #tpu.dot_dimension_numbers<[1], [0], [0], [1], [0, 0, 1, 1], [], []>} : vector<32x128xbf16>, vector<128x128xbf16>, vector<32x128xf32> -> vector<32x128xf32>
    %c0_3 = arith.constant 0 : index
    %c0_4 = arith.constant 0 : index
    %3 = vector.load %arg4[%c0_3, %c0_4] : memref<1x128xf32, #tpu.memory_space<vmem>>, vector<1x128xf32>
    %4 = vector.broadcast %3 : vector<1x128xf32> to vector<32x128xf32>
    %5 = arith.addf %2, %4 : vector<32x128xf32>
    %c0_5 = arith.constant 0 : index
    %c0_6 = arith.constant 0 : index
    %6 = vector.load %arg5[%c0_5, %c0_6] : memref<8x32xf32, #tpu.memory_space<vmem>>, vector<8x32xf32>
    %cst_7 = arith.constant dense<0.000000e+00> : vector<8x128xf32>
    %7 = tpu.matmul %6, %5, %cst_7 {dimension_numbers = #tpu.dot_dimension_numbers<[1], [0], [0], [1], [0, 0, 1, 1], [], []>} : vector<8x32xf32>, vector<32x128xf32>, vector<8x128xf32> -> vector<8x128xf32>
    %8 = arith.truncf %7 : vector<8x128xf32> to vector<8x128xbf16>
    %c0_8 = arith.constant 0 : index
    %c0_9 = arith.constant 0 : index
    %9 = vector.load %arg6[%c0_8, %c0_9] : memref<128x128xbf16, #tpu.memory_space<vmem>>, vector<128x128xbf16>
    %cst_10 = arith.constant dense<0.000000e+00> : vector<8x128xf32>
    %10 = tpu.matmul %8, %9, %cst_10 {dimension_numbers = #tpu.dot_dimension_numbers<[1], [0], [0], [1], [0, 0, 1, 1], [], []>} : vector<8x128xbf16>, vector<128x128xbf16>, vector<8x128xf32> -> vector<8x128xf32>
    %c0_11 = arith.constant 0 : index
    %c0_12 = arith.constant 0 : index
    %11 = vector.load %arg7[%c0_11, %c0_12] : memref<1x128xf32, #tpu.memory_space<vmem>>, vector<1x128xf32>
    %12 = vector.broadcast %11 : vector<1x128xf32> to vector<8x128xf32>
    %13 = arith.addf %10, %12 : vector<8x128xf32>
    %14 = arith.mulf %13, %13 : vector<8x128xf32>
    %cst_13 = arith.constant dense<0.000000e+00> : vector<8xf32>
    %15 = vector.multi_reduction <add>, %14, %cst_13 [1] : vector<8x128xf32> to vector<8xf32>
    %16 = vector.shape_cast %15 : vector<8xf32> to vector<8x1xf32>
    %cst_14 = arith.constant 9.99999996E-13 : f32
    %17 = vector.broadcast %cst_14 : f32 to vector<8x1xf32>
    %18 = arith.addf %16, %17 : vector<8x1xf32>
    %19 = math.rsqrt %18 : vector<8x1xf32>
    %20 = vector.broadcast %19 : vector<8x1xf32> to vector<8x128xf32>
    %21 = arith.mulf %13, %20 : vector<8x128xf32>
    %c0_15 = arith.constant 0 : index
    %c0_16 = arith.constant 0 : index
    %22 = vector.load %arg11[%c0_15, %c0_16] : memref<8x128xf32, #tpu.memory_space<vmem>>, vector<8x128xf32>
    tpu.vector_store %arg11[%c0_15, %c0_16], %21 {strides = array<i32>} : memref<8x128xf32, #tpu.memory_space<vmem>>, vector<8x128xf32>,
    %c0_17 = arith.constant 0 : index
    %c0_18 = arith.constant 0 : index
    %23 = memref.load %arg1[%c0_17, %c0_18] : memref<2x8xi32, #tpu.memory_space<smem>>
    %24 = arith.index_cast %23 : i32 to index
    %c0_19 = arith.constant 0 : index
    %c0_20 = arith.constant 0 : index
    %25 = vector.load %arg8[%24, %c0_19, %c0_20] : memref<128x1x128xf32, #tpu.memory_space<vmem>>, vector<1x1x128xf32>
    %26 = vector.shape_cast %25 : vector<1x1x128xf32> to vector<1x128xf32>
    %c0_21 = arith.constant 0 : index
    %c1 = arith.constant 1 : index
    %27 = memref.load %arg1[%c0_21, %c1] : memref<2x8xi32, #tpu.memory_space<smem>>
    %28 = arith.index_cast %27 : i32 to index
    %c0_22 = arith.constant 0 : index
    %c0_23 = arith.constant 0 : index
    %29 = vector.load %arg8[%28, %c0_22, %c0_23] : memref<128x1x128xf32, #tpu.memory_space<vmem>>, vector<1x1x128xf32>
    %30 = vector.shape_cast %29 : vector<1x1x128xf32> to vector<1x128xf32>
    %31 = arith.addf %26, %30 : vector<1x128xf32>
    %c0_24 = arith.constant 0 : index
    %c2 = arith.constant 2 : index
    %32 = memref.load %arg1[%c0_24, %c2] : memref<2x8xi32, #tpu.memory_space<smem>>
    %33 = arith.index_cast %32 : i32 to index
    %c0_25 = arith.constant 0 : index
    %c0_26 = arith.constant 0 : index
    %34 = vector.load %arg8[%33, %c0_25, %c0_26] : memref<128x1x128xf32, #tpu.memory_space<vmem>>, vector<1x1x128xf32>
    %35 = vector.shape_cast %34 : vector<1x1x128xf32> to vector<1x128xf32>
    %36 = arith.addf %31, %35 : vector<1x128xf32>
    %c0_27 = arith.constant 0 : index
    %c3 = arith.constant 3 : index
    %37 = memref.load %arg1[%c0_27, %c3] : memref<2x8xi32, #tpu.memory_space<smem>>
    %38 = arith.index_cast %37 : i32 to index
    %c0_28 = arith.constant 0 : index
    %c0_29 = arith.constant 0 : index
    %39 = vector.load %arg8[%38, %c0_28, %c0_29] : memref<128x1x128xf32, #tpu.memory_space<vmem>>, vector<1x1x128xf32>
    %40 = vector.shape_cast %39 : vector<1x1x128xf32> to vector<1x128xf32>
    %41 = arith.addf %36, %40 : vector<1x128xf32>
    %c0_30 = arith.constant 0 : index
    %c4 = arith.constant 4 : index
    %42 = memref.load %arg1[%c0_30, %c4] : memref<2x8xi32, #tpu.memory_space<smem>>
    %43 = arith.index_cast %42 : i32 to index
    %c0_31 = arith.constant 0 : index
    %c0_32 = arith.constant 0 : index
    %44 = vector.load %arg8[%43, %c0_31, %c0_32] : memref<128x1x128xf32, #tpu.memory_space<vmem>>, vector<1x1x128xf32>
    %45 = vector.shape_cast %44 : vector<1x1x128xf32> to vector<1x128xf32>
    %46 = arith.addf %41, %45 : vector<1x128xf32>
    %c0_33 = arith.constant 0 : index
    %c5 = arith.constant 5 : index
    %47 = memref.load %arg1[%c0_33, %c5] : memref<2x8xi32, #tpu.memory_space<smem>>
    %48 = arith.index_cast %47 : i32 to index
    %c0_34 = arith.constant 0 : index
    %c0_35 = arith.constant 0 : index
    %49 = vector.load %arg8[%48, %c0_34, %c0_35] : memref<128x1x128xf32, #tpu.memory_space<vmem>>, vector<1x1x128xf32>
    %50 = vector.shape_cast %49 : vector<1x1x128xf32> to vector<1x128xf32>
    %51 = arith.addf %46, %50 : vector<1x128xf32>
    %c0_36 = arith.constant 0 : index
    %c6 = arith.constant 6 : index
    %52 = memref.load %arg1[%c0_36, %c6] : memref<2x8xi32, #tpu.memory_space<smem>>
    %53 = arith.index_cast %52 : i32 to index
    %c0_37 = arith.constant 0 : index
    %c0_38 = arith.constant 0 : index
    %54 = vector.load %arg8[%53, %c0_37, %c0_38] : memref<128x1x128xf32, #tpu.memory_space<vmem>>, vector<1x1x128xf32>
    %55 = vector.shape_cast %54 : vector<1x1x128xf32> to vector<1x128xf32>
    %56 = arith.addf %51, %55 : vector<1x128xf32>
    %c0_39 = arith.constant 0 : index
    %c7 = arith.constant 7 : index
    %57 = memref.load %arg1[%c0_39, %c7] : memref<2x8xi32, #tpu.memory_space<smem>>
    %58 = arith.index_cast %57 : i32 to index
    %c0_40 = arith.constant 0 : index
    %c0_41 = arith.constant 0 : index
    %59 = vector.load %arg8[%58, %c0_40, %c0_41] : memref<128x1x128xf32, #tpu.memory_space<vmem>>, vector<1x1x128xf32>
    %60 = vector.shape_cast %59 : vector<1x1x128xf32> to vector<1x128xf32>
    %61 = arith.addf %56, %60 : vector<1x128xf32>
    %cst_42 = arith.constant 1.250000e-01 : f32
    %62 = vector.broadcast %cst_42 : f32 to vector<1x128xf32>
    %63 = arith.mulf %61, %62 : vector<1x128xf32>
    %c1_43 = arith.constant 1 : index
    %c0_44 = arith.constant 0 : index
    %64 = memref.load %arg1[%c1_43, %c0_44] : memref<2x8xi32, #tpu.memory_space<smem>>
    %65 = arith.index_cast %64 : i32 to index
    %c0_45 = arith.constant 0 : index
    %c0_46 = arith.constant 0 : index
    %66 = vector.load %arg8[%65, %c0_45, %c0_46] : memref<128x1x128xf32, #tpu.memory_space<vmem>>, vector<1x1x128xf32>
    %67 = vector.shape_cast %66 : vector<1x1x128xf32> to vector<1x128xf32>
    %c1_47 = arith.constant 1 : index
    %c1_48 = arith.constant 1 : index
    %68 = memref.load %arg1[%c1_47, %c1_48] : memref<2x8xi32, #tpu.memory_space<smem>>
    %69 = arith.index_cast %68 : i32 to index
    %c0_49 = arith.constant 0 : index
    %c0_50 = arith.constant 0 : index
    %70 = vector.load %arg8[%69, %c0_49, %c0_50] : memref<128x1x128xf32, #tpu.memory_space<vmem>>, vector<1x1x128xf32>
    %71 = vector.shape_cast %70 : vector<1x1x128xf32> to vector<1x128xf32>
    %72 = arith.addf %67, %71 : vector<1x128xf32>
    %c1_51 = arith.constant 1 : index
    %c2_52 = arith.constant 2 : index
    %73 = memref.load %arg1[%c1_51, %c2_52] : memref<2x8xi32, #tpu.memory_space<smem>>
    %74 = arith.index_cast %73 : i32 to index
    %c0_53 = arith.constant 0 : index
    %c0_54 = arith.constant 0 : index
    %75 = vector.load %arg8[%74, %c0_53, %c0_54] : memref<128x1x128xf32, #tpu.memory_space<vmem>>, vector<1x1x128xf32>
    %76 = vector.shape_cast %75 : vector<1x1x128xf32> to vector<1x128xf32>
    %77 = arith.addf %72, %76 : vector<1x128xf32>
    %c1_55 = arith.constant 1 : index
    %c3_56 = arith.constant 3 : index
    %78 = memref.load %arg1[%c1_55, %c3_56] : memref<2x8xi32, #tpu.memory_space<smem>>
    %79 = arith.index_cast %78 : i32 to index
    %c0_57 = arith.constant 0 : index
    %c0_58 = arith.constant 0 : index
    %80 = vector.load %arg8[%79, %c0_57, %c0_58] : memref<128x1x128xf32, #tpu.memory_space<vmem>>, vector<1x1x128xf32>
    %81 = vector.shape_cast %80 : vector<1x1x128xf32> to vector<1x128xf32>
    %82 = arith.addf %77, %81 : vector<1x128xf32>
    %c1_59 = arith.constant 1 : index
    %c4_60 = arith.constant 4 : index
    %83 = memref.load %arg1[%c1_59, %c4_60] : memref<2x8xi32, #tpu.memory_space<smem>>
    %84 = arith.index_cast %83 : i32 to index
    %c0_61 = arith.constant 0 : index
    %c0_62 = arith.constant 0 : index
    %85 = vector.load %arg8[%84, %c0_61, %c0_62] : memref<128x1x128xf32, #tpu.memory_space<vmem>>, vector<1x1x128xf32>
    %86 = vector.shape_cast %85 : vector<1x1x128xf32> to vector<1x128xf32>
    %87 = arith.addf %82, %86 : vector<1x128xf32>
    %c1_63 = arith.constant 1 : index
    %c5_64 = arith.constant 5 : index
    %88 = memref.load %arg1[%c1_63, %c5_64] : memref<2x8xi32, #tpu.memory_space<smem>>
    %89 = arith.index_cast %88 : i32 to index
    %c0_65 = arith.constant 0 : index
    %c0_66 = arith.constant 0 : index
    %90 = vector.load %arg8[%89, %c0_65, %c0_66] : memref<128x1x128xf32, #tpu.memory_space<vmem>>, vector<1x1x128xf32>
    %91 = vector.shape_cast %90 : vector<1x1x128xf32> to vector<1x128xf32>
    %92 = arith.addf %87, %91 : vector<1x128xf32>
    %c1_67 = arith.constant 1 : index
    %c6_68 = arith.constant 6 : index
    %93 = memref.load %arg1[%c1_67, %c6_68] : memref<2x8xi32, #tpu.memory_space<smem>>
    %94 = arith.index_cast %93 : i32 to index
    %c0_69 = arith.constant 0 : index
    %c0_70 = arith.constant 0 : index
    %95 = vector.load %arg8[%94, %c0_69, %c0_70] : memref<128x1x128xf32, #tpu.memory_space<vmem>>, vector<1x1x128xf32>
    %96 = vector.shape_cast %95 : vector<1x1x128xf32> to vector<1x128xf32>
    %97 = arith.addf %92, %96 : vector<1x128xf32>
    %c1_71 = arith.constant 1 : index
    %c7_72 = arith.constant 7 : index
    %98 = memref.load %arg1[%c1_71, %c7_72] : memref<2x8xi32, #tpu.memory_space<smem>>
    %99 = arith.index_cast %98 : i32 to index
    %c0_73 = arith.constant 0 : index
    %c0_74 = arith.constant 0 : index
    %100 = vector.load %arg8[%99, %c0_73, %c0_74] : memref<128x1x128xf32, #tpu.memory_space<vmem>>, vector<1x1x128xf32>
    %101 = vector.shape_cast %100 : vector<1x1x128xf32> to vector<1x128xf32>
    %102 = arith.addf %97, %101 : vector<1x128xf32>
    %cst_75 = arith.constant 1.250000e-01 : f32
    %103 = vector.broadcast %cst_75 : f32 to vector<1x128xf32>
    %104 = arith.mulf %102, %103 : vector<1x128xf32>
    %cst_76 = arith.constant 0.000000e+00 : f32
    %105 = vector.broadcast %cst_76 : f32 to vector<6x128xf32>
    %106 = tpu.concatenate %63, %104, %105 in 0 : vector<1x128xf32>, vector<1x128xf32>, vector<6x128xf32> -> vector<8x128xf32>
    %107 = arith.truncf %106 : vector<8x128xf32> to vector<8x128xbf16>
    %c0_77 = arith.constant 0 : index
    %c0_78 = arith.constant 0 : index
    %108 = vector.load %arg9[%c0_77, %c0_78] : memref<128x128xbf16, #tpu.memory_space<vmem>>, vector<128x128xbf16>
    %cst_79 = arith.constant dense<0.000000e+00> : vector<8x128xf32>
    %109 = tpu.matmul %107, %108, %cst_79 {dimension_numbers = #tpu.dot_dimension_numbers<[1], [0], [0], [1], [0, 0, 1, 1], [], []>} : vector<8x128xbf16>, vector<128x128xbf16>, vector<8x128xf32> -> vector<8x128xf32>
    %c0_80 = arith.constant 0 : index
    %c0_81 = arith.constant 0 : index
    %110 = vector.load %arg10[%c0_80, %c0_81] : memref<1x128xf32, #tpu.memory_space<vmem>>, vector<1x128xf32>
    %111 = vector.broadcast %110 : vector<1x128xf32> to vector<8x128xf32>
    %112 = arith.addf %109, %111 : vector<8x128xf32>
    %113 = arith.mulf %112, %112 : vector<8x128xf32>
    %cst_82 = arith.constant dense<0.000000e+00> : vector<8xf32>
    %114 = vector.multi_reduction <add>, %113, %cst_82 [1] : vector<8x128xf32> to vector<8xf32>
    %115 = vector.shape_cast %114 : vector<8xf32> to vector<8x1xf32>
    %cst_83 = arith.constant 9.99999996E-13 : f32
    %116 = vector.broadcast %cst_83 : f32 to vector<8x1xf32>
    %117 = arith.addf %115, %116 : vector<8x1xf32>
    %118 = math.rsqrt %117 : vector<8x1xf32>
    %119 = vector.broadcast %118 : vector<8x1xf32> to vector<8x128xf32>
    %120 = arith.mulf %112, %119 : vector<8x128xf32>
    %c0_84 = arith.constant 0 : index
    %c0_85 = arith.constant 0 : index
    %121 = vector.load %arg12[%c0_84, %c0_85] : memref<8x128xf32, #tpu.memory_space<vmem>>, vector<8x128xf32>
    tpu.vector_store %arg12[%c0_84, %c0_85], %120 {strides = array<i32>} : memref<8x128xf32, #tpu.memory_space<vmem>>, vector<8x128xf32>,
    return
  }
  func.func @transform_0(%arg0: i32, %arg1: memref<2x8xi32, #tpu.memory_space<smem>>) -> (i32, i32) {
    %c0_i32 = arith.constant 0 : i32
    %c0_i32_0 = arith.constant 0 : i32
    %c0_i32_1 = arith.constant 0 : i32
    return %c0_i32, %c0_i32_0 : i32, i32
  }
  func.func @transform_1(%arg0: i32, %arg1: memref<2x8xi32, #tpu.memory_space<smem>>) -> (i32, i32) {
    %c0_i32 = arith.constant 0 : i32
    %c0_i32_0 = arith.constant 0 : i32
    %c0_i32_1 = arith.constant 0 : i32
    return %c0_i32, %c0_i32_0 : i32, i32
  }
  func.func @transform_2(%arg0: i32, %arg1: memref<2x8xi32, #tpu.memory_space<smem>>) -> (i32, i32) {
    %c0_i32 = arith.constant 0 : i32
    %c0_i32_0 = arith.constant 0 : i32
    %c0_i32_1 = arith.constant 0 : i32
    return %c0_i32, %c0_i32_0 : i32, i32
  }
  func.func @transform_3(%arg0: i32, %arg1: memref<2x8xi32, #tpu.memory_space<smem>>) -> (i32, i32) {
    %c0_i32 = arith.constant 0 : i32
    %c0_i32_0 = arith.constant 0 : i32
    %c0_i32_1 = arith.constant 0 : i32
    return %c0_i32, %c0_i32_0 : i32, i32
  }
  func.func @transform_4(%arg0: i32, %arg1: memref<2x8xi32, #tpu.memory_space<smem>>) -> (i32, i32) {
    %c0_i32 = arith.constant 0 : i32
    %c0_i32_0 = arith.constant 0 : i32
    %c0_i32_1 = arith.constant 0 : i32
    return %c0_i32, %c0_i32_0 : i32, i32
  }
  func.func @transform_5(%arg0: i32, %arg1: memref<2x8xi32, #tpu.memory_space<smem>>) -> (i32, i32) {
    %c0_i32 = arith.constant 0 : i32
    %c0_i32_0 = arith.constant 0 : i32
    %c0_i32_1 = arith.constant 0 : i32
    return %c0_i32, %c0_i32_0 : i32, i32
  }
  func.func @transform_6(%arg0: i32, %arg1: memref<2x8xi32, #tpu.memory_space<smem>>) -> (i32, i32, i32) {
    %c0_i32 = arith.constant 0 : i32
    %c0_i32_0 = arith.constant 0 : i32
    %c0_i32_1 = arith.constant 0 : i32
    %c0_i32_2 = arith.constant 0 : i32
    return %c0_i32, %c0_i32_0, %c0_i32_1 : i32, i32, i32
  }
  func.func @transform_7(%arg0: i32, %arg1: memref<2x8xi32, #tpu.memory_space<smem>>) -> (i32, i32) {
    %c0_i32 = arith.constant 0 : i32
    %c0_i32_0 = arith.constant 0 : i32
    %c0_i32_1 = arith.constant 0 : i32
    return %c0_i32, %c0_i32_0 : i32, i32
  }
  func.func @transform_8(%arg0: i32, %arg1: memref<2x8xi32, #tpu.memory_space<smem>>) -> (i32, i32) {
    %c0_i32 = arith.constant 0 : i32
    %c0_i32_0 = arith.constant 0 : i32
    %c0_i32_1 = arith.constant 0 : i32
    return %c0_i32, %c0_i32_0 : i32, i32
  }
  func.func @transform_9(%arg0: i32, %arg1: memref<2x8xi32, #tpu.memory_space<smem>>) -> (i32, i32) {
    %c0_i32 = arith.constant 0 : i32
    %c0_i32_0 = arith.constant 0 : i32
    %c0_i32_1 = arith.constant 0 : i32
    return %c0_i32, %c0_i32_0 : i32, i32
  }
  func.func @transform_10(%arg0: i32, %arg1: memref<2x8xi32, #tpu.memory_space<smem>>) -> (i32, i32) {
    %c0_i32 = arith.constant 0 : i32
    %c0_i32_0 = arith.constant 0 : i32
    %c0_i32_1 = arith.constant 0 : i32
    return %c0_i32, %c0_i32_0 : i32, i32
  }
}

</mosaic_0001>

<llo_original>
// kernel: _lambda_.1
$region0: #{_lambda_.1}
  #allocation0 [shape = 'u32[]', space=smem, size = 0x4, offset = 0x4, fixed_abs, tag = 'smem constant byte address 0x4 - core index']
  #allocation1 [shape = 'u32[144,128]{1,0:T(1,128)}', space=vmem, size = 0x12000, scoped, tag = 'internal scratch']
  #allocation2 [shape = 's32[1]{0}', space=sflag, size = 0x4, scoped, tag = 'scoped memory for _lambda_.1']
  #allocation3 [shape = 'u8[1024]{0}', space=smem, size = 0x400, scoped, tag = 'prefetched SMEM operand 0']
  %s0 = inlined_call_operand.vmem [shape: s32[2,8], index: 0, kind: input, shape index: {}]
  %s1 = inlined_call_operand.vmem [shape: bf16[32,128], index: 1, kind: input, shape index: {}]
  %s2 = inlined_call_operand.vmem [shape: bf16[128,128], index: 2, kind: input, shape index: {}]
  %s3 = inlined_call_operand.vmem [shape: f32[1,128], index: 3, kind: input, shape index: {}, may-alias: {3,6,9}]
  %s4 = inlined_call_operand.vmem [shape: f32[8,32], index: 4, kind: input, shape index: {}]
  %s5 = inlined_call_operand.vmem [shape: bf16[128,128], index: 5, kind: input, shape index: {}]
  %s6 = inlined_call_operand.vmem [shape: f32[1,128], index: 6, kind: input, shape index: {}, may-alias: {3,6,9}]
  %s7 = inlined_call_operand.vmem [shape: f32[128,1,128], index: 7, kind: input, shape index: {}]
  %s8 = inlined_call_operand.vmem [shape: bf16[128,128], index: 8, kind: input, shape index: {}]
  %s9 = inlined_call_operand.vmem [shape: f32[1,128], index: 9, kind: input, shape index: {}, may-alias: {3,6,9}]
  %s10 = inlined_call_operand.vmem [shape: f32[8,128], index: 10, kind: output, shape index: {0}]
  %s11 = inlined_call_operand.vmem [shape: f32[8,128], index: 11, kind: output, shape index: {1}]
  %12 = xla_tuple %s10, %s11
  %s13 = sld [smem:[#allocation0]]
  $region54: #{_lambda_.1} parent=0
    _
  %s15 = ssub.s32 1, %s13
  %s16 = scalar_select 0, %s15, %s13
  %s17 = sshll.u32 %s0, 4
  %s18 = int_to_ptr.vmem [resolvable:$true] %s17
  %20 = dma.vmem_to_smem %s18, 32, [#allocation3], [#allocation2]
  %21 = dma.done [#allocation2], 32
  %22 = sfence
  // Predicated region
  $region2: #{_lambda_.1} parent=0 // pred_check
    _
  $region3: #{_lambda_.1} parent=0 // pred_check_branch
    %24 = sbr.rel (0) target = $region5
  $region4: #{_lambda_.1} parent=0 // pred_region
    _
  $region5: #{_lambda_.1} parent=0 // pred_fallthru
    _
  // Predicated region
  $region6: #{_lambda_.1} parent=0 // pred_check
    _
  $region7: #{_lambda_.1} parent=0 // pred_check_branch
    %26 = sbr.rel (0) target = $region9
  $region8: #{_lambda_.1} parent=0 // pred_region
    _
  $region9: #{_lambda_.1} parent=0 // pred_fallthru
    _
  // Predicated region
  $region10: #{_lambda_.1} parent=0 // pred_check
    _
  $region11: #{_lambda_.1} parent=0 // pred_check_branch
    %28 = sbr.rel (0) target = $region13
  $region12: #{_lambda_.1} parent=0 // pred_region
    _
  $region13: #{_lambda_.1} parent=0 // pred_fallthru
    _
  // Predicated region
  $region14: #{_lambda_.1} parent=0 // pred_check
    _
  $region15: #{_lambda_.1} parent=0 // pred_check_branch
    %30 = sbr.rel (0) target = $region17
  $region16: #{_lambda_.1} parent=0 // pred_region
    _
  $region17: #{_lambda_.1} parent=0 // pred_fallthru
    _
  // Predicated region
  $region18: #{_lambda_.1} parent=0 // pred_check
    _
  $region19: #{_lambda_.1} parent=0 // pred_check_branch
    %32 = sbr.rel (0) target = $region21
  $region20: #{_lambda_.1} parent=0 // pred_region
    _
  $region21: #{_lambda_.1} parent=0 // pred_fallthru
    _
  // Predicated region
  $region22: #{_lambda_.1} parent=0 // pred_check
    _
  $region23: #{_lambda_.1} parent=0 // pred_check_branch
    %34 = sbr.rel (0) target = $region25
  $region24: #{_lambda_.1} parent=0 // pred_region
    _
  $region25: #{_lambda_.1} parent=0 // pred_fallthru
    _
  // Predicated region
  $region26: #{_lambda_.1} parent=0 // pred_check
    _
  $region27: #{_lambda_.1} parent=0 // pred_check_branch
    %36 = sbr.rel (0) target = $region29
  $region28: #{_lambda_.1} parent=0 // pred_region
    _
  $region29: #{_lambda_.1} parent=0 // pred_fallthru
    _
  // Predicated region
  $region30: #{_lambda_.1} parent=0 // pred_check
    _
  $region31: #{_lambda_.1} parent=0 // pred_check_branch
    %38 = sbr.rel (0) target = $region33
  $region32: #{_lambda_.1} parent=0 // pred_region
    _
  $region33: #{_lambda_.1} parent=0 // pred_fallthru
    _
  // Predicated region
  $region34: #{_lambda_.1} parent=0 // pred_check
    _
  $region35: #{_lambda_.1} parent=0 // pred_check_branch
    %40 = sbr.rel (0) target = $region37
  $region36: #{_lambda_.1} parent=0 // pred_region
    _
  $region37: #{_lambda_.1} parent=0 // pred_fallthru
    _
  %v42 = vld [vmem:[%s1] sm:$0xf]
  %v43 = vld [vmem:[%s1 + $0x4] sm:$0xf]
  %v44 = vld [vmem:[%s1 + $0x8] sm:$0xf]
  %v45 = vld [vmem:[%s1 + $0xc] sm:$0xf]
  %v46 = vld [vmem:[%s2] sm:$0xf]
  %v47 = vld [vmem:[%s2 + $0x4] sm:$0xf]
  %v48 = vld [vmem:[%s2 + $0x8] sm:$0xf]
  %v49 = vld [vmem:[%s2 + $0xc] sm:$0xf]
  %v50 = vld [vmem:[%s2 + $0x10] sm:$0xf]
  %v51 = vld [vmem:[%s2 + $0x14] sm:$0xf]
  %v52 = vld [vmem:[%s2 + $0x18] sm:$0xf]
  %v53 = vld [vmem:[%s2 + $0x1c] sm:$0xf]
  %v54 = vld [vmem:[%s2 + $0x20] sm:$0xf]
  %v55 = vld [vmem:[%s2 + $0x24] sm:$0xf]
  %v56 = vld [vmem:[%s2 + $0x28] sm:$0xf]
  %v57 = vld [vmem:[%s2 + $0x2c] sm:$0xf]
  %v58 = vld [vmem:[%s2 + $0x30] sm:$0xf]
  %v59 = vld [vmem:[%s2 + $0x34] sm:$0xf]
  %v60 = vld [vmem:[%s2 + $0x38] sm:$0xf]
  %v61 = vld [vmem:[%s2 + $0x3c] sm:$0xf]
  %v62 = vld [vmem:[%s3] sm:$0x1]
  %v64 = vlaneseq
  %v65 = vshrl.u32 %v64, 7
  %v66 = vsub.s32 0, %v65
  %v67 = vrot.slane %v62, %v66
  %v73 = vunpack.c.l.b16 %v42
  %v74 = vunpack.c.l.b16 %v43
  %v75 = vunpack.c.l.b16 %v44
  %v76 = vunpack.c.l.b16 %v45
  %v77 = vpack.c.b16 %v74, %v73
  %v78 = vpack.c.b16 %v76, %v75
  %v97 = vunpack.c.l.b16 %v46
  %v98 = vunpack.c.l.b16 %v47
  %v99 = vunpack.c.l.b16 %v48
  %v100 = vunpack.c.l.b16 %v49
  %v101 = vunpack.c.l.b16 %v50
  %v102 = vunpack.c.l.b16 %v51
  %v103 = vunpack.c.l.b16 %v52
  %v104 = vunpack.c.l.b16 %v53
  %v105 = vunpack.c.l.b16 %v54
  %v106 = vunpack.c.l.b16 %v55
  %v107 = vunpack.c.l.b16 %v56
  %v108 = vunpack.c.l.b16 %v57
  %v109 = vunpack.c.l.b16 %v58
  %v110 = vunpack.c.l.b16 %v59
  %v111 = vunpack.c.l.b16 %v60
  %v112 = vunpack.c.l.b16 %v61
  %v113 = vpack.c.b16 %v98, %v97
  %v114 = vpack.c.b16 %v100, %v99
  %v115 = vpack.c.b16 %v102, %v101
  %v116 = vpack.c.b16 %v104, %v103
  %v117 = vpack.c.b16 %v106, %v105
  %v118 = vpack.c.b16 %v108, %v107
  %v119 = vpack.c.b16 %v110, %v109
  %v120 = vpack.c.b16 %v112, %v111
  %129 = vmatprep.subr.bf16.mxu0 0
  %130 = vmatpush1.bf16.msra.mxu0 %v113
  %131 = vmatprep.subr.bf16.mxu0 0
  %132 = vmatpush1.bf16.msra.mxu0 %v114
  %133 = vmatprep.subr.bf16.mxu0 0
  %134 = vmatpush1.bf16.msra.mxu0 %v115
  %135 = vmatprep.subr.bf16.mxu0 0
  %136 = vmatpush1.bf16.msra.mxu0 %v116
  %137 = vmatprep.subr.bf16.mxu0 0
  %138 = vmatpush1.bf16.msra.mxu0 %v117
  %139 = vmatprep.subr.bf16.mxu0 0
  %140 = vmatpush1.bf16.msra.mxu0 %v118
  %141 = vmatprep.subr.bf16.mxu0 0
  %142 = vmatpush1.bf16.msra.mxu0 %v119
  %143 = vmatprep.subr.bf16.mxu0 0
  %144 = vmatpush1.bf16.msra.mxu0 %v120
  %145 = vmatprep.subr.bf16.mxu0 0
  %146 = vmatpush1.bf16.msra.mxu0 0
  %147 = vmatprep.subr.bf16.mxu0 0
  %148 = vmatpush1.bf16.msra.mxu0 0
  %149 = vmatprep.subr.bf16.mxu0 0
  %150 = vmatpush1.bf16.msra.mxu0 0
  %151 = vmatprep.subr.bf16.mxu0 0
  %152 = vmatpush1.bf16.msra.mxu0 0
  %153 = vmatprep.subr.bf16.mxu0 0
  %154 = vmatpush1.bf16.msra.mxu0 0
  %155 = vmatprep.subr.bf16.mxu0 0
  %156 = vmatpush1.bf16.msra.mxu0 0
  %157 = vmatprep.subr.bf16.mxu0 0
  %158 = vmatpush1.bf16.msra.mxu0 0
  %159 = vmatprep.subr.bf16.mxu0 0
  %160 = vmatpush1.bf16.msra.mxu0 0
  %161 = vmatprep.mubr.bf16.mxu0 0
  %162 = vmatmul.mubr.bf16.gmra.mrb[0].mxu0 %v77
  %v163 = vpop.f32.mrb[0].mxu0
  %v164 = vadd.f32 %v67, %v163
  %v165 = vpop.f32.mrb[0].mxu0
  %v166 = vpop.f32.mrb[0].mxu0
  %v167 = vadd.f32 %v67, %v166
  %v168 = vpop.f32.mrb[0].mxu0
  %169 = vmatprep.mubr.bf16.mxu0 0
  %170 = vmatmul.mubr.bf16.gmra.mrb[0].mxu0 %v78
  %v171 = vpop.f32.mrb[0].mxu0
  %v172 = vadd.f32 %v67, %v171
  %v173 = vpop.f32.mrb[0].mxu0
  %v174 = vpop.f32.mrb[0].mxu0
  %v175 = vadd.f32 %v67, %v174
  %v176 = vpop.f32.mrb[0].mxu0
  %177 = vdwg.mxu0
  %v178 = vld [vmem:[%s4] sm:$0xff]
  %vm179 = vcmask 261120
  %v181 = vsel %vm179, %v178, 0
  %183 = vmatprep.subr.mxu0 0.0
  %184 = vmatpush1.msra.mxu0 %v164
  %185 = vmatprep.subr.mxu0 0.0
  %186 = vmatpush1.msra.mxu0 %v167
  %187 = vmatprep.subr.mxu0 0.0
  %188 = vmatpush1.msra.mxu0 %v172
  %189 = vmatprep.subr.mxu0 0.0
  %190 = vmatpush1.msra.mxu0 %v175
  %191 = vmatprep.subr.mxu0 0.0
  %192 = vmatpush1.msra.mxu0 0.0
  %193 = vmatprep.subr.mxu0 0.0
  %194 = vmatpush1.msra.mxu0 0.0
  %195 = vmatprep.subr.mxu0 0.0
  %196 = vmatpush1.msra.mxu0 0.0
  %197 = vmatprep.subr.mxu0 0.0
  %198 = vmatpush1.msra.mxu0 0.0
  %199 = vmatprep.subr.mxu0 0.0
  %200 = vmatpush1.msra.mxu0 0.0
  %201 = vmatprep.subr.mxu0 0.0
  %202 = vmatpush1.msra.mxu0 0.0
  %203 = vmatprep.subr.mxu0 0.0
  %204 = vmatpush1.msra.mxu0 0.0
  %205 = vmatprep.subr.mxu0 0.0
  %206 = vmatpush1.msra.mxu0 0.0
  %207 = vmatprep.subr.mxu0 0.0
  %208 = vmatpush1.msra.mxu0 0.0
  %209 = vmatprep.subr.mxu0 0.0
  %210 = vmatpush1.msra.mxu0 0.0
  %211 = vmatprep.subr.mxu0 0.0
  %212 = vmatpush1.msra.mxu0 0.0
  %213 = vmatprep.subr.mxu0 0.0
  %214 = vmatpush1.msra.mxu0 0.0
  %215 = vmatprep.subr.mxu0 0.0
  %216 = vmatpush1.msra.mxu0 0.0
  %217 = vmatprep.subr.mxu0 0.0
  %218 = vmatpush1.msra.mxu0 0.0
  %219 = vmatprep.subr.mxu0 0.0
  %220 = vmatpush1.msra.mxu0 0.0
  %221 = vmatprep.subr.mxu0 0.0
  %222 = vmatpush1.msra.mxu0 0.0
  %223 = vmatprep.subr.mxu0 0.0
  %224 = vmatpush1.msra.mxu0 0.0
  %225 = vmatprep.subr.mxu0 0.0
  %226 = vmatpush1.msra.mxu0 0.0
  %227 = vmatprep.subr.mxu0 0.0
  %228 = vmatpush1.msra.mxu0 0.0
  %229 = vmatprep.subr.mxu0 0.0
  %230 = vmatpush1.msra.mxu0 0.0
  %231 = vmatprep.subr.mxu0 0.0
  %232 = vmatpush1.msra.mxu0 0.0
  %233 = vmatprep.subr.mxu0 0.0
  %234 = vmatpush1.msra.mxu0 0.0
  %235 = vmatprep.subr.mxu0 0.0
  %236 = vmatpush1.msra.mxu0 0.0
  %237 = vmatprep.subr.mxu0 0.0
  %238 = vmatpush1.msra.mxu0 0.0
  %239 = vmatprep.subr.mxu0 0.0
  %240 = vmatpush1.msra.mxu0 0.0
  %241 = vmatprep.subr.mxu0 0.0
  %242 = vmatpush1.msra.mxu0 0.0
  %243 = vmatprep.subr.mxu0 0.0
  %244 = vmatpush1.msra.mxu0 0.0
  %245 = vmatprep.subr.mxu0 0.0
  %246 = vmatpush1.msra.mxu0 0.0
  %247 = vmatprep.mubr.f32.mxu0 0.0
  %248 = vmatmul.mubr.f32.gmra.mrb[0].mxu0 %v181
  %v249 = vpop.f32.mrb[0].mxu0
  %v250 = vadd.f32 0.0, %v249
  %v251 = vpop.f32.mrb[0].mxu0
  %252 = vdwg.mxu0
  %v253 = vpack.c.bf16 %v250, %v250
  %v254 = vld [vmem:[%s5] sm:$0xf]
  %v255 = vld [vmem:[%s5 + $0x4] sm:$0xf]
  %v256 = vld [vmem:[%s5 + $0x8] sm:$0xf]
  %v257 = vld [vmem:[%s5 + $0xc] sm:$0xf]
  %v258 = vld [vmem:[%s5 + $0x10] sm:$0xf]
  %v259 = vld [vmem:[%s5 + $0x14] sm:$0xf]
  %v260 = vld [vmem:[%s5 + $0x18] sm:$0xf]
  %v261 = vld [vmem:[%s5 + $0x1c] sm:$0xf]
  %v262 = vld [vmem:[%s5 + $0x20] sm:$0xf]
  %v263 = vld [vmem:[%s5 + $0x24] sm:$0xf]
  %v264 = vld [vmem:[%s5 + $0x28] sm:$0xf]
  %v265 = vld [vmem:[%s5 + $0x2c] sm:$0xf]
  %v266 = vld [vmem:[%s5 + $0x30] sm:$0xf]
  %v267 = vld [vmem:[%s5 + $0x34] sm:$0xf]
  %v268 = vld [vmem:[%s5 + $0x38] sm:$0xf]
  %v269 = vld [vmem:[%s5 + $0x3c] sm:$0xf]
  %v270 = vld [vmem:[%s6] sm:$0x1]
  %v272 = vlaneseq
  %v273 = vshrl.u32 %v272, 7
  %v274 = vsub.s32 0, %v273
  %v275 = vrot.slane %v270, %v274
  %v293 = vunpack.c.l.b16 %v254
  %v294 = vunpack.c.l.b16 %v255
  %v295 = vunpack.c.l.b16 %v256
  %v296 = vunpack.c.l.b16 %v257
  %v297 = vunpack.c.l.b16 %v258
  %v298 = vunpack.c.l.b16 %v259
  %v299 = vunpack.c.l.b16 %v260
  %v300 = vunpack.c.l.b16 %v261
  %v301 = vunpack.c.l.b16 %v262
  %v302 = vunpack.c.l.b16 %v263
  %v303 = vunpack.c.l.b16 %v264
  %v304 = vunpack.c.l.b16 %v265
  %v305 = vunpack.c.l.b16 %v266
  %v306 = vunpack.c.l.b16 %v267
  %v307 = vunpack.c.l.b16 %v268
  %v308 = vunpack.c.l.b16 %v269
  %v309 = vpack.c.b16 %v294, %v293
  %v310 = vpack.c.b16 %v296, %v295
  %v311 = vpack.c.b16 %v298, %v297
  %v312 = vpack.c.b16 %v300, %v299
  %v313 = vpack.c.b16 %v302, %v301
  %v314 = vpack.c.b16 %v304, %v303
  %v315 = vpack.c.b16 %v306, %v305
  %v316 = vpack.c.b16 %v308, %v307
  %325 = vmatprep.subr.bf16.mxu0 0
  %326 = vmatpush1.bf16.msra.mxu0 %v309
  %327 = vmatprep.subr.bf16.mxu0 0
  %328 = vmatpush1.bf16.msra.mxu0 %v310
  %329 = vmatprep.subr.bf16.mxu0 0
  %330 = vmatpush1.bf16.msra.mxu0 %v311
  %331 = vmatprep.subr.bf16.mxu0 0
  %332 = vmatpush1.bf16.msra.mxu0 %v312
  %333 = vmatprep.subr.bf16.mxu0 0
  %334 = vmatpush1.bf16.msra.mxu0 %v313
  %335 = vmatprep.subr.bf16.mxu0 0
  %336 = vmatpush1.bf16.msra.mxu0 %v314
  %337 = vmatprep.subr.bf16.mxu0 0
  %338 = vmatpush1.bf16.msra.mxu0 %v315
  %339 = vmatprep.subr.bf16.mxu0 0
  %340 = vmatpush1.bf16.msra.mxu0 %v316
  %341 = vmatprep.subr.bf16.mxu0 0
  %342 = vmatpush1.bf16.msra.mxu0 0
  %343 = vmatprep.subr.bf16.mxu0 0
  %344 = vmatpush1.bf16.msra.mxu0 0
  %345 = vmatprep.subr.bf16.mxu0 0
  %346 = vmatpush1.bf16.msra.mxu0 0
  %347 = vmatprep.subr.bf16.mxu0 0
  %348 = vmatpush1.bf16.msra.mxu0 0
  %349 = vmatprep.subr.bf16.mxu0 0
  %350 = vmatpush1.bf16.msra.mxu0 0
  %351 = vmatprep.subr.bf16.mxu0 0
  %352 = vmatpush1.bf16.msra.mxu0 0
  %353 = vmatprep.subr.bf16.mxu0 0
  %354 = vmatpush1.bf16.msra.mxu0 0
  %355 = vmatprep.subr.bf16.mxu0 0
  %356 = vmatpush1.bf16.msra.mxu0 0
  %357 = vmatprep.mubr.bf16.mxu0 0
  %358 = vmatmul.mubr.bf16.gmra.mrb[0].mxu0 %v253
  %v359 = vpop.f32.mrb[0].mxu0
  %v360 = vadd.f32 %v275, %v359
  %v361 = vpop.f32.mrb[0].mxu0
  %v362 = vpop.f32.mrb[0].mxu0
  %v363 = vpop.f32.mrb[0].mxu0
  %364 = vdwg.mxu0
  %v365 = vmul.f32 %v360, %v360
  %366 = vadd.xlane.f32.xlu0 %v365
  %v367 = vpop.xlane.xlu0 %366
  %v368 = vadd.f32 %v367, 1e-12
  %v369 = vrsqrt.pop %v368
  %v370 = vmul.f32 %v360, %v369
  %371 = vst [vmem:[%s10] sm:$0xff] %v370
  %s372 = sld [smem:[#allocation3]]
  %s373 = scalar_lea.vmem %s7, %s372
  %v374 = vld [vmem:[%s373] sm:$0x1]
  %s375 = sld [smem:[#allocation3 + $0x1]]
  %s376 = scalar_lea.vmem %s7, %s375
  %v377 = vld [vmem:[%s376] sm:$0x1]
  %v378 = vadd.f32 %v374, %v377
  %s379 = sld [smem:[#allocation3 + $0x2]]
  %s380 = scalar_lea.vmem %s7, %s379
  %v381 = vld [vmem:[%s380] sm:$0x1]
  %v382 = vadd.f32 %v378, %v381
  %s383 = sld [smem:[#allocation3 + $0x3]]
  %s384 = scalar_lea.vmem %s7, %s383
  %v385 = vld [vmem:[%s384] sm:$0x1]
  %v386 = vadd.f32 %v382, %v385
  %s387 = sld [smem:[#allocation3 + $0x4]]
  %s388 = scalar_lea.vmem %s7, %s387
  %v389 = vld [vmem:[%s388] sm:$0x1]
  %v390 = vadd.f32 %v386, %v389
  %s391 = sld [smem:[#allocation3 + $0x5]]
  %s392 = scalar_lea.vmem %s7, %s391
  %v393 = vld [vmem:[%s392] sm:$0x1]
  %v394 = vadd.f32 %v390, %v393
  %s395 = sld [smem:[#allocation3 + $0x6]]
  %s396 = scalar_lea.vmem %s7, %s395
  %v397 = vld [vmem:[%s396] sm:$0x1]
  %v398 = vadd.f32 %v394, %v397
  %s399 = sld [smem:[#allocation3 + $0x7]]
  %s400 = scalar_lea.vmem %s7, %s399
  %v401 = vld [vmem:[%s400] sm:$0x1]
  %v402 = vadd.f32 %v398, %v401
  %v403 = vmul.f32 %v402, 0.125
  %s404 = sld [smem:[#allocation3 + $0x80]]
  %s405 = scalar_lea.vmem %s7, %s404
  %v406 = vld [vmem:[%s405] sm:$0x1]
  %s407 = sld [smem:[#allocation3 + $0x81]]
  %s408 = scalar_lea.vmem %s7, %s407
  %v409 = vld [vmem:[%s408] sm:$0x1]
  %v410 = vadd.f32 %v406, %v409
  %s411 = sld [smem:[#allocation3 + $0x82]]
  %s412 = scalar_lea.vmem %s7, %s411
  %v413 = vld [vmem:[%s412] sm:$0x1]
  %v414 = vadd.f32 %v410, %v413
  %s415 = sld [smem:[#allocation3 + $0x83]]
  %s416 = scalar_lea.vmem %s7, %s415
  %v417 = vld [vmem:[%s416] sm:$0x1]
  %v418 = vadd.f32 %v414, %v417
  %s419 = sld [smem:[#allocation3 + $0x84]]
  %s420 = scalar_lea.vmem %s7, %s419
  %v421 = vld [vmem:[%s420] sm:$0x1]
  %v422 = vadd.f32 %v418, %v421
  %s423 = sld [smem:[#allocation3 + $0x85]]
  %s424 = scalar_lea.vmem %s7, %s423
  %v425 = vld [vmem:[%s424] sm:$0x1]
  %v426 = vadd.f32 %v422, %v425
  %s427 = sld [smem:[#allocation3 + $0x86]]
  %s428 = scalar_lea.vmem %s7, %s427
  %v429 = vld [vmem:[%s428] sm:$0x1]
  %v430 = vadd.f32 %v426, %v429
  %s431 = sld [smem:[#allocation3 + $0x87]]
  %s432 = scalar_lea.vmem %s7, %s431
  %v433 = vld [vmem:[%s432] sm:$0x1]
  %v434 = vadd.f32 %v430, %v433
  %v435 = vmul.f32 %v434, 0.125
  %v437 = vlaneseq
  %v438 = vshrl.u32 %v437, 7
  %v439 = vsub.s32 0, %v438
  %v440 = vrot.slane %v435, %v439
  %vm442 = vcmask 1040384
  %v443 = vsel %vm442, %v403, %v440
  %vm444 = vcmask 1041408
  %v445 = vsel %vm444, %v443, 0.0
  %v446 = vpack.c.bf16 %v445, %v445
  %v447 = vld [vmem:[%s8] sm:$0xf]
  %v448 = vld [vmem:[%s8 + $0x4] sm:$0xf]
  %v449 = vld [vmem:[%s8 + $0x8] sm:$0xf]
  %v450 = vld [vmem:[%s8 + $0xc] sm:$0xf]
  %v451 = vld [vmem:[%s8 + $0x10] sm:$0xf]
  %v452 = vld [vmem:[%s8 + $0x14] sm:$0xf]
  %v453 = vld [vmem:[%s8 + $0x18] sm:$0xf]
  %v454 = vld [vmem:[%s8 + $0x1c] sm:$0xf]
  %v455 = vld [vmem:[%s8 + $0x20] sm:$0xf]
  %v456 = vld [vmem:[%s8 + $0x24] sm:$0xf]
  %v457 = vld [vmem:[%s8 + $0x28] sm:$0xf]
  %v458 = vld [vmem:[%s8 + $0x2c] sm:$0xf]
  %v459 = vld [vmem:[%s8 + $0x30] sm:$0xf]
  %v460 = vld [vmem:[%s8 + $0x34] sm:$0xf]
  %v461 = vld [vmem:[%s8 + $0x38] sm:$0xf]
  %v462 = vld [vmem:[%s8 + $0x3c] sm:$0xf]
  %v463 = vld [vmem:[%s9] sm:$0x1]
  %v465 = vlaneseq
  %v466 = vshrl.u32 %v465, 7
  %v467 = vsub.s32 0, %v466
  %v468 = vrot.slane %v463, %v467
  %v486 = vunpack.c.l.b16 %v447
  %v487 = vunpack.c.l.b16 %v448
  %v488 = vunpack.c.l.b16 %v449
  %v489 = vunpack.c.l.b16 %v450
  %v490 = vunpack.c.l.b16 %v451
  %v491 = vunpack.c.l.b16 %v452
  %v492 = vunpack.c.l.b16 %v453
  %v493 = vunpack.c.l.b16 %v454
  %v494 = vunpack.c.l.b16 %v455
  %v495 = vunpack.c.l.b16 %v456
  %v496 = vunpack.c.l.b16 %v457
  %v497 = vunpack.c.l.b16 %v458
  %v498 = vunpack.c.l.b16 %v459
  %v499 = vunpack.c.l.b16 %v460
  %v500 = vunpack.c.l.b16 %v461
  %v501 = vunpack.c.l.b16 %v462
  %v502 = vpack.c.b16 %v487, %v486
  %v503 = vpack.c.b16 %v489, %v488
  %v504 = vpack.c.b16 %v491, %v490
  %v505 = vpack.c.b16 %v493, %v492
  %v506 = vpack.c.b16 %v495, %v494
  %v507 = vpack.c.b16 %v497, %v496
  %v508 = vpack.c.b16 %v499, %v498
  %v509 = vpack.c.b16 %v501, %v500
  %518 = vmatprep.subr.bf16.mxu0 0
  %519 = vmatpush1.bf16.msra.mxu0 %v502
  %520 = vmatprep.subr.bf16.mxu0 0
  %521 = vmatpush1.bf16.msra.mxu0 %v503
  %522 = vmatprep.subr.bf16.mxu0 0
  %523 = vmatpush1.bf16.msra.mxu0 %v504
  %524 = vmatprep.subr.bf16.mxu0 0
  %525 = vmatpush1.bf16.msra.mxu0 %v505
  %526 = vmatprep.subr.bf16.mxu0 0
  %527 = vmatpush1.bf16.msra.mxu0 %v506
  %528 = vmatprep.subr.bf16.mxu0 0
  %529 = vmatpush1.bf16.msra.mxu0 %v507
  %530 = vmatprep.subr.bf16.mxu0 0
  %531 = vmatpush1.bf16.msra.mxu0 %v508
  %532 = vmatprep.subr.bf16.mxu0 0
  %533 = vmatpush1.bf16.msra.mxu0 %v509
  %534 = vmatprep.subr.bf16.mxu0 0
  %535 = vmatpush1.bf16.msra.mxu0 0
  %536 = vmatprep.subr.bf16.mxu0 0
  %537 = vmatpush1.bf16.msra.mxu0 0
  %538 = vmatprep.subr.bf16.mxu0 0
  %539 = vmatpush1.bf16.msra.mxu0 0
  %540 = vmatprep.subr.bf16.mxu0 0
  %541 = vmatpush1.bf16.msra.mxu0 0
  %542 = vmatprep.subr.bf16.mxu0 0
  %543 = vmatpush1.bf16.msra.mxu0 0
  %544 = vmatprep.subr.bf16.mxu0 0
  %545 = vmatpush1.bf16.msra.mxu0 0
  %546 = vmatprep.subr.bf16.mxu0 0
  %547 = vmatpush1.bf16.msra.mxu0 0
  %548 = vmatprep.subr.bf16.mxu0 0
  %549 = vmatpush1.bf16.msra.mxu0 0
  %550 = vmatprep.mubr.bf16.mxu0 0
  %551 = vmatmul.mubr.bf16.gmra.mrb[0].mxu0 %v446
  %v552 = vpop.f32.mrb[0].mxu0
  %v553 = vadd.f32 %v468, %v552
  %v554 = vpop.f32.mrb[0].mxu0
  %v555 = vpop.f32.mrb[0].mxu0
  %v556 = vpop.f32.mrb[0].mxu0
  %557 = vdwg.mxu0
  %v558 = vmul.f32 %v553, %v553
  %559 = vadd.xlane.f32.xlu0 %v558
  %v560 = vpop.xlane.xlu0 %559
  %v561 = vadd.f32 %v560, 1e-12
  %v562 = vrsqrt.pop %v561
  %v563 = vmul.f32 %v553, %v562
  %564 = vst [vmem:[%s11] sm:$0xff] %v563
  // Predicated region
  $region38: #{_lambda_.1} parent=0 // pred_check
    _
  $region39: #{_lambda_.1} parent=0 // pred_check_branch
    %566 = sbr.rel (0) target = $region41
  $region40: #{_lambda_.1} parent=0 // pred_region
    _
  $region41: #{_lambda_.1} parent=0 // pred_fallthru
    _
  // Predicated region
  $region42: #{_lambda_.1} parent=0 // pred_check
    _
  $region43: #{_lambda_.1} parent=0 // pred_check_branch
    %568 = sbr.rel (0) target = $region45
  $region44: #{_lambda_.1} parent=0 // pred_region
    _
  $region45: #{_lambda_.1} parent=0 // pred_fallthru
    _
  // Predicated region
  $region46: #{_lambda_.1} parent=0 // pred_check
    _
  $region47: #{_lambda_.1} parent=0 // pred_check_branch
    %570 = sbr.rel (0) target = $region49
  $region48: #{_lambda_.1} parent=0 // pred_region
    _
  $region49: #{_lambda_.1} parent=0 // pred_fallthru
    _
  // Predicated region
  $region50: #{_lambda_.1} parent=0 // pred_check
    _
  $region51: #{_lambda_.1} parent=0 // pred_check_branch
    %572 = sbr.rel (0) target = $region53
  $region52: #{_lambda_.1} parent=0 // pred_region
    _
  $region53: #{_lambda_.1} parent=0 // pred_fallthru
    _

</llo_original>
